<compile_context>
chip_gen: v5e
topology: v5e:2x2
jax: 0.10.0
libtpu: 0.0.40
codegen_flags: <defaults>
</compile_context>

<pallas_src>
import jax
import jax.numpy as jnp
from jax.experimental import pallas as pl
from jax.experimental.pallas import tpu as pltpu

N_BRANCH = 3          # branches fed by E, F, I
HID = 64              # hidden width of every layer
LANES = 128           # TPU lane width


def _round_up(x, m):
    return (x + m - 1) // m * m


def mlp3_kernel(e_ref, f_ref, i_ref,
                bw_ref, bb_ref, w1_ref, b1_ref, w2_ref, b2_ref, out_ref):
    # e/f/i_ref: (1, tb)        E^T, F^T, I^T rows (batch in lanes), f32
    # bw_ref:    (64, 3)        column k = Linear(1,64).weight of branch k
    # bb_ref:    (64, 3)        column k = Linear(1,64).bias   of branch k
    # w1_ref:    (3, 64, 64)    w1_ref[k] = fc1.weight[:, 64k:64k+64]
    # b1_ref:    (64, 1)        fc1 bias (column)
    # w2_ref:    (out_dim, 64)  fc2 weight (torch layout, no transpose needed)
    # b2_ref:    (out_dim, 1)   fc2 bias (column)
    # out_ref:   (out_dim, tb)  batch in lanes
    x_rows = (e_ref[...], f_ref[...], i_ref[...])            # each (1, tb)

    # Branch layer on the VPU + fc1 split per branch on the MXU:
    #   relu(concat_k branch_k) @ W1^T  ==  sum_k W1[:, 64k:64k+64] @ branch_k^T
    acc = None
    for k in range(N_BRANCH):
        hk = jnp.maximum(bw_ref[:, k:k + 1] * x_rows[k] + bb_ref[:, k:k + 1],
                         0.0)                                 # (64, tb) VPU FMA+relu
        part = jnp.dot(w1_ref[k], hk,
                       preferred_element_type=jnp.float32)    # (64, tb) MXU
        acc = part if acc is None else acc + part

    h1 = jnp.maximum(acc + b1_ref[...], 0.0)                  # (64, tb)

    out = jnp.dot(w2_ref[...], h1,
                  preferred_element_type=jnp.float32) + b2_ref[...]   # (out_dim, tb)
    out_ref[...] = out.astype(out_ref.dtype)


def init_params(key, output_dim):
    """Deterministic synthetic init matching the PyTorch parameter shapes."""
    ks = jax.random.split(key, 6)
    # fc_E1 / fc_F1 / fc_G1: Linear(1,64) -> weight (64,1) squeezed -> (3,64)
    branch_w = jax.random.uniform(ks[0], (N_BRANCH, HID), jnp.float32, -1.0, 1.0)
    branch_b = jax.random.uniform(ks[1], (N_BRANCH, HID), jnp.float32, -1.0, 1.0)
    # fc1: Linear(192, 64)
    fc1_w = jax.random.uniform(ks[2], (HID, N_BRANCH * HID), jnp.float32, -0.07, 0.07)
    fc1_b = jax.random.uniform(ks[3], (HID,), jnp.float32, -0.07, 0.07)
    # fc2: Linear(64, output_dim)
    fc2_w = jax.random.uniform(ks[4], (output_dim, HID), jnp.float32, -0.125, 0.125)
    fc2_b = jax.random.uniform(ks[5], (output_dim,), jnp.float32, -0.125, 0.125)
    return dict(branch_w=branch_w, branch_b=branch_b,
                fc1_w=fc1_w, fc1_b=fc1_b, fc2_w=fc2_w, fc2_b=fc2_b)


def prepare_kernel_params(params):
    """One-time feature-major layout prep (kept out of the per-call path)."""
    out_dim = params["fc2_w"].shape[0]
    # fc1.weight (64, 192) split per branch into (3, 64, 64):
    w1_split = params["fc1_w"].reshape(HID, N_BRANCH, HID).transpose(1, 0, 2)
    return dict(
        bw=params["branch_w"].T,                    # (64, 3)
        bb=params["branch_b"].T,                    # (64, 3)
        w1=w1_split,                                # (3, 64, 64)
        b1=params["fc1_b"].reshape(HID, 1),         # (64, 1)
        w2=params["fc2_w"],                         # (out_dim, 64)
        b2=params["fc2_b"].reshape(out_dim, 1),     # (out_dim, 1)
        out_dim=out_dim,
    )


def _pick_tb(bsz, tb):
    if tb is not None:
        return tb
    if bsz <= LANES:
        return bsz                                  # single full-lane block
    # Batch lives in lanes, so tb must be a multiple of 128 (or the full dim).
    # Large tiles amortize per-step overhead; >=2 steps keeps both v7x TCs busy.
    # (v7x can profitably go above 4096; per-step VMEM is ~1 MiB so even v5e's
    #  16 MiB scoped default is never a constraint.)
    return min(4096, _round_up(pl.cdiv(bsz, 2), LANES))


def mlp_model3(kparams, A, B, C, D, E, F, G, H, I, *,
               tb=None, out_dtype=jnp.float32, transpose_output=True):
    # Only E, F, I feed the network (fc_G1 is applied to I in the PyTorch model).
    del A, B, C, D, G, H
    bsz = E.shape[0]
    out_dim = kparams["out_dim"]

    # (B,1) -> (1,B): pure reshape of contiguous data, no wrapper concat needed.
    e = E.reshape(1, bsz).astype(jnp.float32)
    f = F.reshape(1, bsz).astype(jnp.float32)
    i_row = I.reshape(1, bsz).astype(jnp.float32)

    tb = _pick_tb(bsz, tb)
    grid = (pl.cdiv(bsz, tb),)

    out_fm = pl.pallas_call(
        mlp3_kernel,
        out_shape=jax.ShapeDtypeStruct((out_dim, bsz), out_dtype),
        grid=grid,
        in_specs=[
            pl.BlockSpec((1, tb), lambda i: (0, i)),              # E row, streamed
            pl.BlockSpec((1, tb), lambda i: (0, i)),              # F row
            pl.BlockSpec((1, tb), lambda i: (0, i)),              # I row
            pl.BlockSpec(kparams["bw"].shape, lambda i: (0, 0)),  # VMEM-resident params
            pl.BlockSpec(kparams["bb"].shape, lambda i: (0, 0)),
            pl.BlockSpec(kparams["w1"].shape, lambda i: (0, 0, 0)),
            pl.BlockSpec(kparams["b1"].shape, lambda i: (0, 0)),
            pl.BlockSpec(kparams["w2"].shape, lambda i: (0, 0)),
            pl.BlockSpec(kparams["b2"].shape, lambda i: (0, 0)),
        ],
        out_specs=pl.BlockSpec((out_dim, tb), lambda i: (0, i)),  # batch in lanes
        compiler_params=pltpu.CompilerParams(
            dimension_semantics=("parallel",)),                   # shard batch on v7x
    )(e, f, i_row, kparams["bw"], kparams["bb"], kparams["w1"],
      kparams["b1"], kparams["w2"], kparams["b2"])

    if transpose_output:
        return out_fm.T          # (B, out_dim) to match the PyTorch module
    return out_fm                # (out_dim, B) for consumers that accept it lazily


def mlp_model3_ref(params, A, B, C, D, E, F, G, H, I):
    """Pure-JAX reference matching the PyTorch forward exactly."""
    del A, B, C, D, G, H
    hp = jax.lax.Precision.HIGHEST
    branches = []
    for k, inp in enumerate([E, F, I]):
        w = params["branch_w"][k].reshape(HID, 1)     # torch Linear(1,64).weight
        b = params["branch_b"][k]
        branches.append(jnp.maximum(jnp.dot(inp, w.T, precision=hp) + b, 0.0))
    x_all = jnp.concatenate(branches, axis=1)         # (B, 192)
    h = jnp.maximum(jnp.dot(x_all, params["fc1_w"].T, precision=hp) + params["fc1_b"], 0.0)
    return jnp.dot(h, params["fc2_w"].T, precision=hp) + params["fc2_b"]


if __name__ == "__main__":
    batch = 8
    output_dim = 8

    key = jax.random.PRNGKey(0)
    keys = jax.random.split(key, 9)
    A, B, C, D, E, F, G, H, I = [
        jax.random.normal(k, (batch, 1), jnp.float32) for k in keys
    ]

    params = init_params(jax.random.PRNGKey(42), output_dim)
    kp = prepare_kernel_params(params)
    ref = mlp_model3_ref(params, A, B, C, D, E, F, G, H, I)

    # Small batch: single block, full batch in lanes.
    out = jax.block_until_ready(mlp_model3(kp, A, B, C, D, E, F, G, H, I))
    assert out.shape == (batch, output_dim)
    assert jnp.allclose(out, ref, atol=2e-3, rtol=2e-2), "kernel mismatch vs reference"

    # Larger batch: grid > 1 (both v7x TCs), partial last lane-block (300 % 256 != 0).
    batch2 = 300
    keys2 = jax.random.split(jax.random.PRNGKey(7), 9)
    ins2 = [jax.random.normal(k, (batch2, 1), jnp.float32) for k in keys2]
    ref2 = mlp_model3_ref(params, *ins2)
    out2 = jax.block_until_ready(mlp_model3(kp, *ins2))
    assert out2.shape == (batch2, output_dim)
    assert jnp.allclose(out2, ref2, atol=2e-3, rtol=2e-2), "tiled kernel mismatch vs reference"

    # Optional bf16-output fast path (halves store bytes on v6e/v7x; f32 accumulate).
    out2_bf16 = jax.block_until_ready(
        mlp_model3(kp, *ins2, out_dtype=jnp.bfloat16))
    assert jnp.allclose(out2_bf16.astype(jnp.float32), ref2, atol=3e-2, rtol=1e-1), \
        "bf16-output kernel mismatch vs reference"

    print("KERNEL_OK")
</pallas_src>

<mosaic_0001>
module attributes {stable_mosaic.version = 11 : i64} {
  func.func @mlp3_kernel(%arg0: i32, %arg1: memref<1x8xf32, #tpu.memory_space<vmem>>, %arg2: memref<1x8xf32, #tpu.memory_space<vmem>>, %arg3: memref<1x8xf32, #tpu.memory_space<vmem>>, %arg4: memref<64x3xf32, #tpu.memory_space<vmem>>, %arg5: memref<64x3xf32, #tpu.memory_space<vmem>>, %arg6: memref<3x64x64xf32, #tpu.memory_space<vmem>>, %arg7: memref<64x1xf32, #tpu.memory_space<vmem>>, %arg8: memref<8x64xf32, #tpu.memory_space<vmem>>, %arg9: memref<8x1xf32, #tpu.memory_space<vmem>>, %arg10: memref<8x8xf32, #tpu.memory_space<vmem>>) attributes {dimension_semantics = [#tpu.dimension_semantics<parallel>], iteration_bounds = array<i64: 1>, scalar_prefetch = 0 : i64, scratch_operands = 0 : i64, tpu.core_type = #tpu.core_type<tc>, window_params = [{transform_indices = @transform_0, window_bounds = array<i64: 1, 8>}, {transform_indices = @transform_1, window_bounds = array<i64: 1, 8>}, {transform_indices = @transform_2, window_bounds = array<i64: 1, 8>}, {pipeline_mode = #tpu.pipeline_mode<synchronous>, transform_indices = @transform_3, window_bounds = array<i64: 64, 3>}, {pipeline_mode = #tpu.pipeline_mode<synchronous>, transform_indices = @transform_4, window_bounds = array<i64: 64, 3>}, {pipeline_mode = #tpu.pipeline_mode<synchronous>, transform_indices = @transform_5, window_bounds = array<i64: 3, 64, 64>}, {pipeline_mode = #tpu.pipeline_mode<synchronous>, transform_indices = @transform_6, window_bounds = array<i64: 64, 1>}, {pipeline_mode = #tpu.pipeline_mode<synchronous>, transform_indices = @transform_7, window_bounds = array<i64: 8, 64>}, {pipeline_mode = #tpu.pipeline_mode<synchronous>, transform_indices = @transform_8, window_bounds = array<i64: 8, 1>}, {transform_indices = @transform_9, window_bounds = array<i64: 8, 8>}]} {
    %c0 = arith.constant 0 : index
    %c0_0 = arith.constant 0 : index
    %0 = vector.load %arg1[%c0, %c0_0] : memref<1x8xf32, #tpu.memory_space<vmem>>, vector<1x8xf32>
    %c0_1 = arith.constant 0 : index
    %c0_2 = arith.constant 0 : index
    %1 = vector.load %arg2[%c0_1, %c0_2] : memref<1x8xf32, #tpu.memory_space<vmem>>, vector<1x8xf32>
    %c0_3 = arith.constant 0 : index
    %c0_4 = arith.constant 0 : index
    %2 = vector.load %arg3[%c0_3, %c0_4] : memref<1x8xf32, #tpu.memory_space<vmem>>, vector<1x8xf32>
    %c0_5 = arith.constant 0 : index
    %c0_6 = arith.constant 0 : index
    %3 = vector.load %arg4[%c0_5, %c0_6] : memref<64x3xf32, #tpu.memory_space<vmem>>, vector<64x1xf32>
    %4 = vector.broadcast %3 : vector<64x1xf32> to vector<64x8xf32>
    %5 = vector.broadcast %0 : vector<1x8xf32> to vector<64x8xf32>
    %6 = arith.mulf %4, %5 : vector<64x8xf32>
    %c0_7 = arith.constant 0 : index
    %c0_8 = arith.constant 0 : index
    %7 = vector.load %arg5[%c0_7, %c0_8] : memref<64x3xf32, #tpu.memory_space<vmem>>, vector<64x1xf32>
    %8 = vector.broadcast %7 : vector<64x1xf32> to vector<64x8xf32>
    %9 = arith.addf %6, %8 : vector<64x8xf32>
    %cst = arith.constant 0.000000e+00 : f32
    %10 = vector.broadcast %cst : f32 to vector<64x8xf32>
    %11 = arith.maximumf %9, %10 : vector<64x8xf32>
    %c0_9 = arith.constant 0 : index
    %c0_10 = arith.constant 0 : index
    %c0_11 = arith.constant 0 : index
    %12 = vector.load %arg6[%c0_9, %c0_10, %c0_11] : memref<3x64x64xf32, #tpu.memory_space<vmem>>, vector<1x64x64xf32>
    %13 = vector.shape_cast %12 : vector<1x64x64xf32> to vector<64x64xf32>
    %cst_12 = arith.constant dense<0.000000e+00> : vector<64x8xf32>
    %14 = tpu.matmul %13, %11, %cst_12 {dimension_numbers = #tpu.dot_dimension_numbers<[1], [0], [0], [1], [0, 0, 1, 1], [], []>} : vector<64x64xf32>, vector<64x8xf32>, vector<64x8xf32> -> vector<64x8xf32>
    %c0_13 = arith.constant 0 : index
    %c1 = arith.constant 1 : index
    %15 = vector.load %arg4[%c0_13, %c1] : memref<64x3xf32, #tpu.memory_space<vmem>>, vector<64x1xf32>
    %16 = vector.broadcast %15 : vector<64x1xf32> to vector<64x8xf32>
    %17 = vector.broadcast %1 : vector<1x8xf32> to vector<64x8xf32>
    %18 = arith.mulf %16, %17 : vector<64x8xf32>
    %c0_14 = arith.constant 0 : index
    %c1_15 = arith.constant 1 : index
    %19 = vector.load %arg5[%c0_14, %c1_15] : memref<64x3xf32, #tpu.memory_space<vmem>>, vector<64x1xf32>
    %20 = vector.broadcast %19 : vector<64x1xf32> to vector<64x8xf32>
    %21 = arith.addf %18, %20 : vector<64x8xf32>
    %cst_16 = arith.constant 0.000000e+00 : f32
    %22 = vector.broadcast %cst_16 : f32 to vector<64x8xf32>
    %23 = arith.maximumf %21, %22 : vector<64x8xf32>
    %c1_17 = arith.constant 1 : index
    %c0_18 = arith.constant 0 : index
    %c0_19 = arith.constant 0 : index
    %24 = vector.load %arg6[%c1_17, %c0_18, %c0_19] : memref<3x64x64xf32, #tpu.memory_space<vmem>>, vector<1x64x64xf32>
    %25 = vector.shape_cast %24 : vector<1x64x64xf32> to vector<64x64xf32>
    %cst_20 = arith.constant dense<0.000000e+00> : vector<64x8xf32>
    %26 = tpu.matmul %25, %23, %cst_20 {dimension_numbers = #tpu.dot_dimension_numbers<[1], [0], [0], [1], [0, 0, 1, 1], [], []>} : vector<64x64xf32>, vector<64x8xf32>, vector<64x8xf32> -> vector<64x8xf32>
    %27 = arith.addf %14, %26 : vector<64x8xf32>
    %c0_21 = arith.constant 0 : index
    %c2 = arith.constant 2 : index
    %28 = vector.load %arg4[%c0_21, %c2] : memref<64x3xf32, #tpu.memory_space<vmem>>, vector<64x1xf32>
    %29 = vector.broadcast %28 : vector<64x1xf32> to vector<64x8xf32>
    %30 = vector.broadcast %2 : vector<1x8xf32> to vector<64x8xf32>
    %31 = arith.mulf %29, %30 : vector<64x8xf32>
    %c0_22 = arith.constant 0 : index
    %c2_23 = arith.constant 2 : index
    %32 = vector.load %arg5[%c0_22, %c2_23] : memref<64x3xf32, #tpu.memory_space<vmem>>, vector<64x1xf32>
    %33 = vector.broadcast %32 : vector<64x1xf32> to vector<64x8xf32>
    %34 = arith.addf %31, %33 : vector<64x8xf32>
    %cst_24 = arith.constant 0.000000e+00 : f32
    %35 = vector.broadcast %cst_24 : f32 to vector<64x8xf32>
    %36 = arith.maximumf %34, %35 : vector<64x8xf32>
    %c2_25 = arith.constant 2 : index
    %c0_26 = arith.constant 0 : index
    %c0_27 = arith.constant 0 : index
    %37 = vector.load %arg6[%c2_25, %c0_26, %c0_27] : memref<3x64x64xf32, #tpu.memory_space<vmem>>, vector<1x64x64xf32>
    %38 = vector.shape_cast %37 : vector<1x64x64xf32> to vector<64x64xf32>
    %cst_28 = arith.constant dense<0.000000e+00> : vector<64x8xf32>
    %39 = tpu.matmul %38, %36, %cst_28 {dimension_numbers = #tpu.dot_dimension_numbers<[1], [0], [0], [1], [0, 0, 1, 1], [], []>} : vector<64x64xf32>, vector<64x8xf32>, vector<64x8xf32> -> vector<64x8xf32>
    %40 = arith.addf %27, %39 : vector<64x8xf32>
    %c0_29 = arith.constant 0 : index
    %c0_30 = arith.constant 0 : index
    %41 = vector.load %arg7[%c0_29, %c0_30] : memref<64x1xf32, #tpu.memory_space<vmem>>, vector<64x1xf32>
    %42 = vector.broadcast %41 : vector<64x1xf32> to vector<64x8xf32>
    %43 = arith.addf %40, %42 : vector<64x8xf32>
    %cst_31 = arith.constant 0.000000e+00 : f32
    %44 = vector.broadcast %cst_31 : f32 to vector<64x8xf32>
    %45 = arith.maximumf %43, %44 : vector<64x8xf32>
    %c0_32 = arith.constant 0 : index
    %c0_33 = arith.constant 0 : index
    %46 = vector.load %arg8[%c0_32, %c0_33] : memref<8x64xf32, #tpu.memory_space<vmem>>, vector<8x64xf32>
    %cst_34 = arith.constant dense<0.000000e+00> : vector<8x8xf32>
    %47 = tpu.matmul %46, %45, %cst_34 {dimension_numbers = #tpu.dot_dimension_numbers<[1], [0], [0], [1], [0, 0, 1, 1], [], []>} : vector<8x64xf32>, vector<64x8xf32>, vector<8x8xf32> -> vector<8x8xf32>
    %c0_35 = arith.constant 0 : index
    %c0_36 = arith.constant 0 : index
    %48 = vector.load %arg9[%c0_35, %c0_36] : memref<8x1xf32, #tpu.memory_space<vmem>>, vector<8x1xf32>
    %49 = vector.broadcast %48 : vector<8x1xf32> to vector<8x8xf32>
    %50 = arith.addf %47, %49 : vector<8x8xf32>
    %c0_37 = arith.constant 0 : index
    %c0_38 = arith.constant 0 : index
    %51 = vector.load %arg10[%c0_37, %c0_38] : memref<8x8xf32, #tpu.memory_space<vmem>>, vector<8x8xf32>
    tpu.vector_store %arg10[%c0_37, %c0_38], %50 {strides = array<i32>} : memref<8x8xf32, #tpu.memory_space<vmem>>, vector<8x8xf32>,
    return
  }
  func.func @transform_0(%arg0: i32) -> (i32, i32) {
    %c0_i32 = arith.constant 0 : i32
    %c0_i32_0 = arith.constant 0 : i32
    return %c0_i32, %arg0 : i32, i32
  }
  func.func @transform_1(%arg0: i32) -> (i32, i32) {
    %c0_i32 = arith.constant 0 : i32
    %c0_i32_0 = arith.constant 0 : i32
    return %c0_i32, %arg0 : i32, i32
  }
  func.func @transform_2(%arg0: i32) -> (i32, i32) {
    %c0_i32 = arith.constant 0 : i32
    %c0_i32_0 = arith.constant 0 : i32
    return %c0_i32, %arg0 : i32, i32
  }
  func.func @transform_3(%arg0: i32) -> (i32, i32) {
    %c0_i32 = arith.constant 0 : i32
    %c0_i32_0 = arith.constant 0 : i32
    %c0_i32_1 = arith.constant 0 : i32
    return %c0_i32, %c0_i32_0 : i32, i32
  }
  func.func @transform_4(%arg0: i32) -> (i32, i32) {
    %c0_i32 = arith.constant 0 : i32
    %c0_i32_0 = arith.constant 0 : i32
    %c0_i32_1 = arith.constant 0 : i32
    return %c0_i32, %c0_i32_0 : i32, i32
  }
  func.func @transform_5(%arg0: i32) -> (i32, i32, i32) {
    %c0_i32 = arith.constant 0 : i32
    %c0_i32_0 = arith.constant 0 : i32
    %c0_i32_1 = arith.constant 0 : i32
    %c0_i32_2 = arith.constant 0 : i32
    return %c0_i32, %c0_i32_0, %c0_i32_1 : i32, i32, i32
  }
  func.func @transform_6(%arg0: i32) -> (i32, i32) {
    %c0_i32 = arith.constant 0 : i32
    %c0_i32_0 = arith.constant 0 : i32
    %c0_i32_1 = arith.constant 0 : i32
    return %c0_i32, %c0_i32_0 : i32, i32
  }
  func.func @transform_7(%arg0: i32) -> (i32, i32) {
    %c0_i32 = arith.constant 0 : i32
    %c0_i32_0 = arith.constant 0 : i32
    %c0_i32_1 = arith.constant 0 : i32
    return %c0_i32, %c0_i32_0 : i32, i32
  }
  func.func @transform_8(%arg0: i32) -> (i32, i32) {
    %c0_i32 = arith.constant 0 : i32
    %c0_i32_0 = arith.constant 0 : i32
    %c0_i32_1 = arith.constant 0 : i32
    return %c0_i32, %c0_i32_0 : i32, i32
  }
  func.func @transform_9(%arg0: i32) -> (i32, i32) {
    %c0_i32 = arith.constant 0 : i32
    %c0_i32_0 = arith.constant 0 : i32
    return %c0_i32, %arg0 : i32, i32
  }
}

</mosaic_0001>

<llo_original>
// kernel: tpu_custom_call.1
$region0: #{tpu_custom_call.1}
  #allocation0 [shape = 'u32[]', space=smem, size = 0x4, offset = 0x4, fixed_abs, tag = 'smem constant byte address 0x4 - core index']
  #allocation1 [shape = 'u32[72,128]{1,0:T(1,128)}', space=vmem, size = 0x9000, scoped, tag = 'internal scratch']
  %s0 = inlined_call_operand.vmem [shape: f32[1,8], index: 0, kind: input, shape index: {}]
  %s1 = inlined_call_operand.vmem [shape: f32[1,8], index: 1, kind: input, shape index: {}]
  %s2 = inlined_call_operand.vmem [shape: f32[1,8], index: 2, kind: input, shape index: {}]
  %s3 = inlined_call_operand.vmem [shape: f32[64,3], index: 3, kind: input, shape index: {}]
  %s4 = inlined_call_operand.vmem [shape: f32[64,3], index: 4, kind: input, shape index: {}]
  %s5 = inlined_call_operand.hbm [shape: f32[3,64,64], index: 5, kind: input, shape index: {}]
  %s6 = inlined_call_operand.vmem [shape: f32[64,1], index: 6, kind: input, shape index: {}]
  %s7 = inlined_call_operand.vmem [shape: f32[8,64], index: 7, kind: input, shape index: {}]
  %s8 = inlined_call_operand.vmem [shape: f32[8,1], index: 8, kind: input, shape index: {}]
  %s9 = inlined_call_operand.hbm [shape: f32[8,8], index: 9, kind: output, shape index: {}]
  %s10 = sld [smem:[#allocation0]]
  $region50: #{tpu_custom_call.1} parent=0
    _
  %s12 = ssub.s32 1, %s10
  %s13 = scalar_select 0, %s12, %s10
  $region1: #{tpu_custom_call.1} parent=0
    #allocation2 [shape = 'u8[98304]{0}', space=vmem, size = 0x18000, scoped, tag = 'input window, operand 5, single buffered']
    #allocation3 [shape = 's32[1]{0}', space=sflag, size = 0x4, scoped, tag = 'scoped memory for tpu_custom_call.1']
    #allocation4 [shape = 's32[1]{0}', space=sflag, size = 0x4, scoped, tag = 'scoped memory for tpu_custom_call.1']
    #allocation5 [shape = 'u8[4096]{0}', space=vmem, size = 0x1000, scoped, tag = 'output window, operand 0, single buffered']
    %14 = vsyncpa [#allocation3], 0
    %15 = vsyncpa [#allocation4], 0
    // Predicated region
    $region2: #{tpu_custom_call.1} parent=1 // pred_check
      _
    $region3: #{tpu_custom_call.1} parent=1 // pred_check_branch
      %17 = sbr.rel (0) target = $region5
    $region4: #{tpu_custom_call.1} parent=1 // pred_region
      _
    $region5: #{tpu_custom_call.1} parent=1 // pred_fallthru
      _
    // Predicated region
    $region6: #{tpu_custom_call.1} parent=1 // pred_check
      _
    $region7: #{tpu_custom_call.1} parent=1 // pred_check_branch
      %19 = sbr.rel (0) target = $region9
    $region8: #{tpu_custom_call.1} parent=1 // pred_region
      _
    $region9: #{tpu_custom_call.1} parent=1 // pred_fallthru
      _
    // Predicated region
    $region10: #{tpu_custom_call.1} parent=1 // pred_check
      _
    $region11: #{tpu_custom_call.1} parent=1 // pred_check_branch
      %21 = sbr.rel (0) target = $region13
    $region12: #{tpu_custom_call.1} parent=1 // pred_region
      _
    $region13: #{tpu_custom_call.1} parent=1 // pred_fallthru
      _
    // Predicated region
    $region14: #{tpu_custom_call.1} parent=1 // pred_check
      _
    $region15: #{tpu_custom_call.1} parent=1 // pred_check_branch
      %23 = sbr.rel (0) target = $region17
    $region16: #{tpu_custom_call.1} parent=1 // pred_region
      _
    $region17: #{tpu_custom_call.1} parent=1 // pred_fallthru
      _
    // Predicated region
    $region18: #{tpu_custom_call.1} parent=1 // pred_check
      _
    $region19: #{tpu_custom_call.1} parent=1 // pred_check_branch
      %25 = sbr.rel (0) target = $region21
    $region20: #{tpu_custom_call.1} parent=1 // pred_region
      _
    $region21: #{tpu_custom_call.1} parent=1 // pred_fallthru
      _
    // Predicated region
    $region22: #{tpu_custom_call.1} parent=1 // pred_check
      _
    $region23: #{tpu_custom_call.1} parent=1 // pred_check_branch
      %27 = sbr.rel (0) target = $region25
    $region24: #{tpu_custom_call.1} parent=1 // pred_region
      %29 = vsyncadd [#allocation3], 0
      %s30 = sshll.u32 %s5, 4
      %s31 = int_to_ptr.hbm [resolvable:$true] %s30
      %s32 = sshll.u32 [#allocation2], 4
      %s33 = int_to_ptr.vmem [resolvable:$true] %s32
      %38 = dma.hbm_to_vmem [thread:$0]  %s31, 3072, %s33, [#allocation3], 128, 128, 8
    $region25: #{tpu_custom_call.1} parent=1 // pred_fallthru
      _
    // Predicated region
    $region26: #{tpu_custom_call.1} parent=1 // pred_check
      _
    $region27: #{tpu_custom_call.1} parent=1 // pred_check_branch
      %40 = sbr.rel (0) target = $region29
    $region28: #{tpu_custom_call.1} parent=1 // pred_region
      _
    $region29: #{tpu_custom_call.1} parent=1 // pred_fallthru
      _
    // Predicated region
    $region30: #{tpu_custom_call.1} parent=1 // pred_check
      _
    $region31: #{tpu_custom_call.1} parent=1 // pred_check_branch
      %42 = sbr.rel (0) target = $region33
    $region32: #{tpu_custom_call.1} parent=1 // pred_region
      _
    $region33: #{tpu_custom_call.1} parent=1 // pred_fallthru
      _
    // Predicated region
    $region34: #{tpu_custom_call.1} parent=1 // pred_check
      _
    $region35: #{tpu_custom_call.1} parent=1 // pred_check_branch
      %44 = sbr.rel (0) target = $region37
    $region36: #{tpu_custom_call.1} parent=1 // pred_region
      _
    $region37: #{tpu_custom_call.1} parent=1 // pred_fallthru
      _
    // Predicated region
    $region38: #{tpu_custom_call.1} parent=1 // pred_check
      _
    $region39: #{tpu_custom_call.1} parent=1 // pred_check_branch
      %46 = sbr.rel (0) target = $region41
    $region40: #{tpu_custom_call.1} parent=1 // pred_region
      %48 = dma.done [#allocation3], 3072
    $region41: #{tpu_custom_call.1} parent=1 // pred_fallthru
      _
    %v49 = vld [vmem:[%s0] sm:$0x1]
    %v50 = vld [vmem:[%s1] sm:$0x1]
    %v51 = vld [vmem:[%s2] sm:$0x1]
    %v52 = vld [vmem:[%s3] sm:$0xff]
    %v53 = vld [vmem:[%s3 + $0x8] sm:$0xff]
    %v54 = vld [vmem:[%s3 + $0x10] sm:$0xff]
    %v55 = vld [vmem:[%s3 + $0x18] sm:$0xff]
    %v56 = vld [vmem:[%s3 + $0x20] sm:$0xff]
    %v57 = vld [vmem:[%s3 + $0x28] sm:$0xff]
    %v58 = vld [vmem:[%s3 + $0x30] sm:$0xff]
    %v59 = vld [vmem:[%s3 + $0x38] sm:$0xff]
    %61 = vset.pattern.permute.xlu0 0
    %62 = vperm.xlu0 %61, %v52
    %v63 = vpop.permute.xlu0 %62
    %66 = vset.pattern.permute.xlu0 0
    %67 = vperm.xlu0 %66, %v53
    %v68 = vpop.permute.xlu0 %67
    %71 = vset.pattern.permute.xlu0 0
    %72 = vperm.xlu0 %71, %v54
    %v73 = vpop.permute.xlu0 %72
    %76 = vset.pattern.permute.xlu0 0
    %77 = vperm.xlu0 %76, %v55
    %v78 = vpop.permute.xlu0 %77
    %81 = vset.pattern.permute.xlu0 0
    %82 = vperm.xlu0 %81, %v56
    %v83 = vpop.permute.xlu0 %82
    %86 = vset.pattern.permute.xlu0 0
    %87 = vperm.xlu0 %86, %v57
    %v88 = vpop.permute.xlu0 %87
    %91 = vset.pattern.permute.xlu0 0
    %92 = vperm.xlu0 %91, %v58
    %v93 = vpop.permute.xlu0 %92
    %96 = vset.pattern.permute.xlu0 0
    %97 = vperm.xlu0 %96, %v59
    %v98 = vpop.permute.xlu0 %97
    %v101 = vperm.slane %v49, 0
    %v103 = vmul.f32 %v63, %v101
    %v104 = vmul.f32 %v68, %v101
    %v105 = vmul.f32 %v73, %v101
    %v106 = vmul.f32 %v78, %v101
    %v107 = vmul.f32 %v83, %v101
    %v108 = vmul.f32 %v88, %v101
    %v109 = vmul.f32 %v93, %v101
    %v110 = vmul.f32 %v98, %v101
    %v111 = vld [vmem:[%s4] sm:$0xff]
    %v112 = vld [vmem:[%s4 + $0x8] sm:$0xff]
    %v113 = vld [vmem:[%s4 + $0x10] sm:$0xff]
    %v114 = vld [vmem:[%s4 + $0x18] sm:$0xff]
    %v115 = vld [vmem:[%s4 + $0x20] sm:$0xff]
    %v116 = vld [vmem:[%s4 + $0x28] sm:$0xff]
    %v117 = vld [vmem:[%s4 + $0x30] sm:$0xff]
    %v118 = vld [vmem:[%s4 + $0x38] sm:$0xff]
    %120 = vset.pattern.permute.xlu0 0
    %121 = vperm.xlu0 %120, %v111
    %v122 = vpop.permute.xlu0 %121
    %125 = vset.pattern.permute.xlu0 0
    %126 = vperm.xlu0 %125, %v112
    %v127 = vpop.permute.xlu0 %126
    %130 = vset.pattern.permute.xlu0 0
    %131 = vperm.xlu0 %130, %v113
    %v132 = vpop.permute.xlu0 %131
    %135 = vset.pattern.permute.xlu0 0
    %136 = vperm.xlu0 %135, %v114
    %v137 = vpop.permute.xlu0 %136
    %140 = vset.pattern.permute.xlu0 0
    %141 = vperm.xlu0 %140, %v115
    %v142 = vpop.permute.xlu0 %141
    %145 = vset.pattern.permute.xlu0 0
    %146 = vperm.xlu0 %145, %v116
    %v147 = vpop.permute.xlu0 %146
    %150 = vset.pattern.permute.xlu0 0
    %151 = vperm.xlu0 %150, %v117
    %v152 = vpop.permute.xlu0 %151
    %155 = vset.pattern.permute.xlu0 0
    %156 = vperm.xlu0 %155, %v118
    %v157 = vpop.permute.xlu0 %156
    %v159 = vadd.f32 %v103, %v122
    %v160 = vadd.f32 %v104, %v127
    %v161 = vadd.f32 %v105, %v132
    %v162 = vadd.f32 %v106, %v137
    %v163 = vadd.f32 %v107, %v142
    %v164 = vadd.f32 %v108, %v147
    %v165 = vadd.f32 %v109, %v152
    %v166 = vadd.f32 %v110, %v157
    %v167 = vmax.f32 %v159, 0.0
    %v168 = vmax.f32 %v160, 0.0
    %v169 = vmax.f32 %v161, 0.0
    %v170 = vmax.f32 %v162, 0.0
    %v171 = vmax.f32 %v163, 0.0
    %v172 = vmax.f32 %v164, 0.0
    %v173 = vmax.f32 %v165, 0.0
    %v174 = vmax.f32 %v166, 0.0
    %v175 = vld [vmem:[#allocation2] sm:$0xff]
    %v176 = vld [vmem:[#allocation2 + $0x8] sm:$0xff]
    %v177 = vld [vmem:[#allocation2 + $0x10] sm:$0xff]
    %v178 = vld [vmem:[#allocation2 + $0x18] sm:$0xff]
    %v179 = vld [vmem:[#allocation2 + $0x20] sm:$0xff]
    %v180 = vld [vmem:[#allocation2 + $0x28] sm:$0xff]
    %v181 = vld [vmem:[#allocation2 + $0x30] sm:$0xff]
    %v182 = vld [vmem:[#allocation2 + $0x38] sm:$0xff]
    %183 = vset.pattern.permute.xlu0 1
    %184 = vperm.xlu0 %183, %v52
    %v185 = vpop.permute.xlu0 %184
    %187 = vset.pattern.permute.xlu0 1
    %188 = vperm.xlu0 %187, %v53
    %v189 = vpop.permute.xlu0 %188
    %191 = vset.pattern.permute.xlu0 1
    %192 = vperm.xlu0 %191, %v54
    %v193 = vpop.permute.xlu0 %192
    %195 = vset.pattern.permute.xlu0 1
    %196 = vperm.xlu0 %195, %v55
    %v197 = vpop.permute.xlu0 %196
    %199 = vset.pattern.permute.xlu0 1
    %200 = vperm.xlu0 %199, %v56
    %v201 = vpop.permute.xlu0 %200
    %203 = vset.pattern.permute.xlu0 1
    %204 = vperm.xlu0 %203, %v57
    %v205 = vpop.permute.xlu0 %204
    %207 = vset.pattern.permute.xlu0 1
    %208 = vperm.xlu0 %207, %v58
    %v209 = vpop.permute.xlu0 %208
    %211 = vset.pattern.permute.xlu0 1
    %212 = vperm.xlu0 %211, %v59
    %v213 = vpop.permute.xlu0 %212
    %v216 = vperm.slane %v50, 0
    %v218 = vmul.f32 %v185, %v216
    %v219 = vmul.f32 %v189, %v216
    %v220 = vmul.f32 %v193, %v216
    %v221 = vmul.f32 %v197, %v216
    %v222 = vmul.f32 %v201, %v216
    %v223 = vmul.f32 %v205, %v216
    %v224 = vmul.f32 %v209, %v216
    %v225 = vmul.f32 %v213, %v216
    %226 = vset.pattern.permute.xlu0 1
    %227 = vperm.xlu0 %226, %v111
    %v228 = vpop.permute.xlu0 %227
    %230 = vset.pattern.permute.xlu0 1
    %231 = vperm.xlu0 %230, %v112
    %v232 = vpop.permute.xlu0 %231
    %234 = vset.pattern.permute.xlu0 1
    %235 = vperm.xlu0 %234, %v113
    %v236 = vpop.permute.xlu0 %235
    %238 = vset.pattern.permute.xlu0 1
    %239 = vperm.xlu0 %238, %v114
    %v240 = vpop.permute.xlu0 %239
    %242 = vset.pattern.permute.xlu0 1
    %243 = vperm.xlu0 %242, %v115
    %v244 = vpop.permute.xlu0 %243
    %246 = vset.pattern.permute.xlu0 1
    %247 = vperm.xlu0 %246, %v116
    %v248 = vpop.permute.xlu0 %247
    %250 = vset.pattern.permute.xlu0 1
    %251 = vperm.xlu0 %250, %v117
    %v252 = vpop.permute.xlu0 %251
    %254 = vset.pattern.permute.xlu0 1
    %255 = vperm.xlu0 %254, %v118
    %v256 = vpop.permute.xlu0 %255
    %v258 = vadd.f32 %v218, %v228
    %v259 = vadd.f32 %v219, %v232
    %v260 = vadd.f32 %v220, %v236
    %v261 = vadd.f32 %v221, %v240
    %v262 = vadd.f32 %v222, %v244
    %v263 = vadd.f32 %v223, %v248
    %v264 = vadd.f32 %v224, %v252
    %v265 = vadd.f32 %v225, %v256
    %v266 = vmax.f32 %v258, 0.0
    %v267 = vmax.f32 %v259, 0.0
    %v268 = vmax.f32 %v260, 0.0
    %v269 = vmax.f32 %v261, 0.0
    %v270 = vmax.f32 %v262, 0.0
    %v271 = vmax.f32 %v263, 0.0
    %v272 = vmax.f32 %v264, 0.0
    %v273 = vmax.f32 %v265, 0.0
    %s274 = scalar_lea.vmem [#allocation2], 64
    %v275 = vld [vmem:[%s274] sm:$0xff]
    %v276 = vld [vmem:[%s274 + $0x8] sm:$0xff]
    %v277 = vld [vmem:[%s274 + $0x10] sm:$0xff]
    %v278 = vld [vmem:[%s274 + $0x18] sm:$0xff]
    %v279 = vld [vmem:[%s274 + $0x20] sm:$0xff]
    %v280 = vld [vmem:[%s274 + $0x28] sm:$0xff]
    %v281 = vld [vmem:[%s274 + $0x30] sm:$0xff]
    %v282 = vld [vmem:[%s274 + $0x38] sm:$0xff]
    %vm283 = vcmask 523264
    %v285 = vsel %vm283, %v275, 0
    %v288 = vsel %vm283, %v276, 0
    %v291 = vsel %vm283, %v277, 0
    %v294 = vsel %vm283, %v278, 0
    %v297 = vsel %vm283, %v279, 0
    %v300 = vsel %vm283, %v280, 0
    %v303 = vsel %vm283, %v281, 0
    %v306 = vsel %vm283, %v282, 0
    %308 = vmatpush.msra.mxu0 0.0
    %309 = vmatpush.msra.mxu0 0.0
    %310 = vmatpush.msra.mxu0 0.0
    %311 = vmatpush.msra.mxu0 0.0
    %312 = vmatpush.msra.mxu0 0.0
    %313 = vmatpush.msra.mxu0 0.0
    %314 = vmatpush.msra.mxu0 0.0
    %315 = vmatpush.msra.mxu0 0.0
    %316 = vmatpush.msra.mxu0 %v273
    %317 = vmatpush.msra.mxu0 %v272
    %318 = vmatpush.msra.mxu0 %v271
    %319 = vmatpush.msra.mxu0 %v270
    %320 = vmatpush.msra.mxu0 %v269
    %321 = vmatpush.msra.mxu0 %v268
    %322 = vmatpush.msra.mxu0 %v267
    %323 = vmatpush.msra.mxu0 %v266
    %324 = vmatmul.f32.gmra.mxu0 %v285
    %v325 = vpop.f32.mrf.mxu0
    %v326 = vadd.f32 0.0, %v325
    %327 = vmatmul.f32.gmra.mxu0 %v288
    %v328 = vpop.f32.mrf.mxu0
    %v329 = vadd.f32 0.0, %v328
    %330 = vmatmul.f32.gmra.mxu0 %v291
    %v331 = vpop.f32.mrf.mxu0
    %v332 = vadd.f32 0.0, %v331
    %333 = vmatmul.f32.gmra.mxu0 %v294
    %v334 = vpop.f32.mrf.mxu0
    %v335 = vadd.f32 0.0, %v334
    %336 = vmatmul.f32.gmra.mxu0 %v297
    %v337 = vpop.f32.mrf.mxu0
    %v338 = vadd.f32 0.0, %v337
    %339 = vmatmul.f32.gmra.mxu0 %v300
    %v340 = vpop.f32.mrf.mxu0
    %v341 = vadd.f32 0.0, %v340
    %342 = vmatmul.f32.gmra.mxu0 %v303
    %v343 = vpop.f32.mrf.mxu0
    %v344 = vadd.f32 0.0, %v343
    %345 = vmatmul.f32.gmra.mxu0 %v306
    %v346 = vpop.f32.mrf.mxu0
    %v347 = vadd.f32 0.0, %v346
    %348 = vdwg.mxu0
    %v350 = vsel %vm283, %v175, 0
    %v353 = vsel %vm283, %v176, 0
    %v356 = vsel %vm283, %v177, 0
    %v359 = vsel %vm283, %v178, 0
    %v362 = vsel %vm283, %v179, 0
    %v365 = vsel %vm283, %v180, 0
    %v368 = vsel %vm283, %v181, 0
    %v371 = vsel %vm283, %v182, 0
    %373 = vmatpush.msra.mxu0 0.0
    %374 = vmatpush.msra.mxu0 0.0
    %375 = vmatpush.msra.mxu0 0.0
    %376 = vmatpush.msra.mxu0 0.0
    %377 = vmatpush.msra.mxu0 0.0
    %378 = vmatpush.msra.mxu0 0.0
    %379 = vmatpush.msra.mxu0 0.0
    %380 = vmatpush.msra.mxu0 0.0
    %381 = vmatpush.msra.mxu0 %v174
    %382 = vmatpush.msra.mxu0 %v173
    %383 = vmatpush.msra.mxu0 %v172
    %384 = vmatpush.msra.mxu0 %v171
    %385 = vmatpush.msra.mxu0 %v170
    %386 = vmatpush.msra.mxu0 %v169
    %387 = vmatpush.msra.mxu0 %v168
    %388 = vmatpush.msra.mxu0 %v167
    %389 = vmatmul.f32.gmra.mxu0 %v350
    %v390 = vpop.f32.mrf.mxu0
    %v391 = vadd.f32 %v326, %v390
    %392 = vmatmul.f32.gmra.mxu0 %v353
    %v393 = vpop.f32.mrf.mxu0
    %v394 = vadd.f32 %v329, %v393
    %395 = vmatmul.f32.gmra.mxu0 %v356
    %v396 = vpop.f32.mrf.mxu0
    %v397 = vadd.f32 %v332, %v396
    %398 = vmatmul.f32.gmra.mxu0 %v359
    %v399 = vpop.f32.mrf.mxu0
    %v400 = vadd.f32 %v335, %v399
    %401 = vmatmul.f32.gmra.mxu0 %v362
    %v402 = vpop.f32.mrf.mxu0
    %v403 = vadd.f32 %v338, %v402
    %404 = vmatmul.f32.gmra.mxu0 %v365
    %v405 = vpop.f32.mrf.mxu0
    %v406 = vadd.f32 %v341, %v405
    %407 = vmatmul.f32.gmra.mxu0 %v368
    %v408 = vpop.f32.mrf.mxu0
    %v409 = vadd.f32 %v344, %v408
    %410 = vmatmul.f32.gmra.mxu0 %v371
    %v411 = vpop.f32.mrf.mxu0
    %v412 = vadd.f32 %v347, %v411
    %413 = vdwg.mxu0
    %414 = vset.pattern.permute.xlu0 2
    %415 = vperm.xlu0 %414, %v52
    %v416 = vpop.permute.xlu0 %415
    %418 = vset.pattern.permute.xlu0 2
    %419 = vperm.xlu0 %418, %v53
    %v420 = vpop.permute.xlu0 %419
    %422 = vset.pattern.permute.xlu0 2
    %423 = vperm.xlu0 %422, %v54
    %v424 = vpop.permute.xlu0 %423
    %426 = vset.pattern.permute.xlu0 2
    %427 = vperm.xlu0 %426, %v55
    %v428 = vpop.permute.xlu0 %427
    %430 = vset.pattern.permute.xlu0 2
    %431 = vperm.xlu0 %430, %v56
    %v432 = vpop.permute.xlu0 %431
    %434 = vset.pattern.permute.xlu0 2
    %435 = vperm.xlu0 %434, %v57
    %v436 = vpop.permute.xlu0 %435
    %438 = vset.pattern.permute.xlu0 2
    %439 = vperm.xlu0 %438, %v58
    %v440 = vpop.permute.xlu0 %439
    %442 = vset.pattern.permute.xlu0 2
    %443 = vperm.xlu0 %442, %v59
    %v444 = vpop.permute.xlu0 %443
    %v447 = vperm.slane %v51, 0
    %v449 = vmul.f32 %v416, %v447
    %v450 = vmul.f32 %v420, %v447
    %v451 = vmul.f32 %v424, %v447
    %v452 = vmul.f32 %v428, %v447
    %v453 = vmul.f32 %v432, %v447
    %v454 = vmul.f32 %v436, %v447
    %v455 = vmul.f32 %v440, %v447
    %v456 = vmul.f32 %v444, %v447
    %457 = vset.pattern.permute.xlu0 2
    %458 = vperm.xlu0 %457, %v111
    %v459 = vpop.permute.xlu0 %458
    %461 = vset.pattern.permute.xlu0 2
    %462 = vperm.xlu0 %461, %v112
    %v463 = vpop.permute.xlu0 %462
    %465 = vset.pattern.permute.xlu0 2
    %466 = vperm.xlu0 %465, %v113
    %v467 = vpop.permute.xlu0 %466
    %469 = vset.pattern.permute.xlu0 2
    %470 = vperm.xlu0 %469, %v114
    %v471 = vpop.permute.xlu0 %470
    %473 = vset.pattern.permute.xlu0 2
    %474 = vperm.xlu0 %473, %v115
    %v475 = vpop.permute.xlu0 %474
    %477 = vset.pattern.permute.xlu0 2
    %478 = vperm.xlu0 %477, %v116
    %v479 = vpop.permute.xlu0 %478
    %481 = vset.pattern.permute.xlu0 2
    %482 = vperm.xlu0 %481, %v117
    %v483 = vpop.permute.xlu0 %482
    %485 = vset.pattern.permute.xlu0 2
    %486 = vperm.xlu0 %485, %v118
    %v487 = vpop.permute.xlu0 %486
    %v489 = vadd.f32 %v449, %v459
    %v490 = vadd.f32 %v450, %v463
    %v491 = vadd.f32 %v451, %v467
    %v492 = vadd.f32 %v452, %v471
    %v493 = vadd.f32 %v453, %v475
    %v494 = vadd.f32 %v454, %v479
    %v495 = vadd.f32 %v455, %v483
    %v496 = vadd.f32 %v456, %v487
    %v497 = vmax.f32 %v489, 0.0
    %v498 = vmax.f32 %v490, 0.0
    %v499 = vmax.f32 %v491, 0.0
    %v500 = vmax.f32 %v492, 0.0
    %v501 = vmax.f32 %v493, 0.0
    %v502 = vmax.f32 %v494, 0.0
    %v503 = vmax.f32 %v495, 0.0
    %v504 = vmax.f32 %v496, 0.0
    %s505 = scalar_lea.vmem [#allocation2], 128
    %v506 = vld [vmem:[%s505] sm:$0xff]
    %v507 = vld [vmem:[%s505 + $0x8] sm:$0xff]
    %v508 = vld [vmem:[%s505 + $0x10] sm:$0xff]
    %v509 = vld [vmem:[%s505 + $0x18] sm:$0xff]
    %v510 = vld [vmem:[%s505 + $0x20] sm:$0xff]
    %v511 = vld [vmem:[%s505 + $0x28] sm:$0xff]
    %v512 = vld [vmem:[%s505 + $0x30] sm:$0xff]
    %v513 = vld [vmem:[%s505 + $0x38] sm:$0xff]
    %v515 = vsel %vm283, %v506, 0
    %v518 = vsel %vm283, %v507, 0
    %v521 = vsel %vm283, %v508, 0
    %v524 = vsel %vm283, %v509, 0
    %v527 = vsel %vm283, %v510, 0
    %v530 = vsel %vm283, %v511, 0
    %v533 = vsel %vm283, %v512, 0
    %v536 = vsel %vm283, %v513, 0
    %538 = vmatpush.msra.mxu0 0.0
    %539 = vmatpush.msra.mxu0 0.0
    %540 = vmatpush.msra.mxu0 0.0
    %541 = vmatpush.msra.mxu0 0.0
    %542 = vmatpush.msra.mxu0 0.0
    %543 = vmatpush.msra.mxu0 0.0
    %544 = vmatpush.msra.mxu0 0.0
    %545 = vmatpush.msra.mxu0 0.0
    %546 = vmatpush.msra.mxu0 %v504
    %547 = vmatpush.msra.mxu0 %v503
    %548 = vmatpush.msra.mxu0 %v502
    %549 = vmatpush.msra.mxu0 %v501
    %550 = vmatpush.msra.mxu0 %v500
    %551 = vmatpush.msra.mxu0 %v499
    %552 = vmatpush.msra.mxu0 %v498
    %553 = vmatpush.msra.mxu0 %v497
    %554 = vmatmul.f32.gmra.mxu0 %v515
    %v555 = vpop.f32.mrf.mxu0
    %v556 = vadd.f32 0.0, %v555
    %557 = vmatmul.f32.gmra.mxu0 %v518
    %v558 = vpop.f32.mrf.mxu0
    %v559 = vadd.f32 0.0, %v558
    %560 = vmatmul.f32.gmra.mxu0 %v521
    %v561 = vpop.f32.mrf.mxu0
    %v562 = vadd.f32 0.0, %v561
    %563 = vmatmul.f32.gmra.mxu0 %v524
    %v564 = vpop.f32.mrf.mxu0
    %v565 = vadd.f32 0.0, %v564
    %566 = vmatmul.f32.gmra.mxu0 %v527
    %v567 = vpop.f32.mrf.mxu0
    %v568 = vadd.f32 0.0, %v567
    %569 = vmatmul.f32.gmra.mxu0 %v530
    %v570 = vpop.f32.mrf.mxu0
    %v571 = vadd.f32 0.0, %v570
    %572 = vmatmul.f32.gmra.mxu0 %v533
    %v573 = vpop.f32.mrf.mxu0
    %v574 = vadd.f32 0.0, %v573
    %575 = vmatmul.f32.gmra.mxu0 %v536
    %v576 = vpop.f32.mrf.mxu0
    %v577 = vadd.f32 0.0, %v576
    %578 = vdwg.mxu0
    %v579 = vadd.f32 %v391, %v556
    %v580 = vadd.f32 %v394, %v559
    %v581 = vadd.f32 %v397, %v562
    %v582 = vadd.f32 %v400, %v565
    %v583 = vadd.f32 %v403, %v568
    %v584 = vadd.f32 %v406, %v571
    %v585 = vadd.f32 %v409, %v574
    %v586 = vadd.f32 %v412, %v577
    %v587 = vld [vmem:[%s6] sm:$0xff]
    %v588 = vld [vmem:[%s6 + $0x8] sm:$0xff]
    %v589 = vld [vmem:[%s6 + $0x10] sm:$0xff]
    %v590 = vld [vmem:[%s6 + $0x18] sm:$0xff]
    %v591 = vld [vmem:[%s6 + $0x20] sm:$0xff]
    %v592 = vld [vmem:[%s6 + $0x28] sm:$0xff]
    %v593 = vld [vmem:[%s6 + $0x30] sm:$0xff]
    %v594 = vld [vmem:[%s6 + $0x38] sm:$0xff]
    %596 = vset.pattern.permute.xlu0 0
    %597 = vperm.xlu0 %596, %v587
    %v598 = vpop.permute.xlu0 %597
    %601 = vset.pattern.permute.xlu0 0
    %602 = vperm.xlu0 %601, %v588
    %v603 = vpop.permute.xlu0 %602
    %606 = vset.pattern.permute.xlu0 0
    %607 = vperm.xlu0 %606, %v589
    %v608 = vpop.permute.xlu0 %607
    %611 = vset.pattern.permute.xlu0 0
    %612 = vperm.xlu0 %611, %v590
    %v613 = vpop.permute.xlu0 %612
    %616 = vset.pattern.permute.xlu0 0
    %617 = vperm.xlu0 %616, %v591
    %v618 = vpop.permute.xlu0 %617
    %621 = vset.pattern.permute.xlu0 0
    %622 = vperm.xlu0 %621, %v592
    %v623 = vpop.permute.xlu0 %622
    %626 = vset.pattern.permute.xlu0 0
    %627 = vperm.xlu0 %626, %v593
    %v628 = vpop.permute.xlu0 %627
    %631 = vset.pattern.permute.xlu0 0
    %632 = vperm.xlu0 %631, %v594
    %v633 = vpop.permute.xlu0 %632
    %v635 = vadd.f32 %v579, %v598
    %v636 = vadd.f32 %v580, %v603
    %v637 = vadd.f32 %v581, %v608
    %v638 = vadd.f32 %v582, %v613
    %v639 = vadd.f32 %v583, %v618
    %v640 = vadd.f32 %v584, %v623
    %v641 = vadd.f32 %v585, %v628
    %v642 = vadd.f32 %v586, %v633
    %v643 = vmax.f32 %v635, 0.0
    %v644 = vmax.f32 %v636, 0.0
    %v645 = vmax.f32 %v637, 0.0
    %v646 = vmax.f32 %v638, 0.0
    %v647 = vmax.f32 %v639, 0.0
    %v648 = vmax.f32 %v640, 0.0
    %v649 = vmax.f32 %v641, 0.0
    %v650 = vmax.f32 %v642, 0.0
    %v651 = vld [vmem:[%s7] sm:$0xff]
    %v652 = vld [vmem:[%s8] sm:$0xff]
    %654 = vset.pattern.permute.xlu0 0
    %655 = vperm.xlu0 %654, %v652
    %v656 = vpop.permute.xlu0 %655
    %v659 = vsel %vm283, %v651, 0
    %661 = vmatpush.msra.mxu0 0.0
    %662 = vmatpush.msra.mxu0 0.0
    %663 = vmatpush.msra.mxu0 0.0
    %664 = vmatpush.msra.mxu0 0.0
    %665 = vmatpush.msra.mxu0 0.0
    %666 = vmatpush.msra.mxu0 0.0
    %667 = vmatpush.msra.mxu0 0.0
    %668 = vmatpush.msra.mxu0 0.0
    %669 = vmatpush.msra.mxu0 %v650
    %670 = vmatpush.msra.mxu0 %v649
    %671 = vmatpush.msra.mxu0 %v648
    %672 = vmatpush.msra.mxu0 %v647
    %673 = vmatpush.msra.mxu0 %v646
    %674 = vmatpush.msra.mxu0 %v645
    %675 = vmatpush.msra.mxu0 %v644
    %676 = vmatpush.msra.mxu0 %v643
    %677 = vmatmul.f32.gmra.mxu0 %v659
    %v678 = vpop.f32.mrf.mxu0
    %v679 = vadd.f32 %v656, %v678
    %680 = vdwg.mxu0
    %vm681 = vcmask 64512
    %682 = vst.msk [vmem:[#allocation5] sm:$0xff] %vm681, %v679
    // Predicated region
    $region42: #{tpu_custom_call.1} parent=1 // pred_check
      _
    $region43: #{tpu_custom_call.1} parent=1 // pred_check_branch
      %684 = sbr.rel (0) target = $region45
    $region44: #{tpu_custom_call.1} parent=1 // pred_region
      %686 = vsyncadd [#allocation4], 0
      %s688 = sshll.u32 [#allocation5], 4
      %s689 = int_to_ptr.vmem [resolvable:$true] %s688
      %s690 = sshll.u32 %s9, 4
      %s691 = int_to_ptr.hbm [resolvable:$true] %s690
      %693 = dma.vmem_to_hbm [thread:$0]  %s689, 128, %s691, [#allocation4]
    $region45: #{tpu_custom_call.1} parent=1 // pred_fallthru
      _
    // Predicated region
    $region46: #{tpu_custom_call.1} parent=1 // pred_check
      _
    $region47: #{tpu_custom_call.1} parent=1 // pred_check_branch
      %695 = sbr.rel (0) target = $region49
    $region48: #{tpu_custom_call.1} parent=1 // pred_region
      %697 = dma.done [#allocation4], 128
    $region49: #{tpu_custom_call.1} parent=1 // pred_fallthru
      _
    %698 = vsyncpa [#allocation3], 1
    %699 = vsyncpa [#allocation4], 1

</llo_original>
